<compile_context>
chip_gen: v7x
topology: tpu7x:2x2x1
jax: 0.10.0
libtpu: 0.0.40
codegen_flags: <defaults>
</compile_context>

<pallas_src>
import jax
import jax.numpy as jnp
from jax.experimental import pallas as pl
from jax.experimental.pallas import tpu as pltpu


# 2048 rows * 128 lanes * 4 B = 1 MiB per f32 tile; double-buffered in + out
# = ~4 MiB VMEM, safe on v5e/v6e (128 MiB) and v7x (64 MiB, 32 MiB scoped).
DEFAULT_TILE_ROWS = 2048


def _droppath_kernel(scale_ref, x_ref, o_ref):
    # scale_ref: SMEM (B,) f32, per-sample scale = floor(keep + u) / keep (0 or 1/keep)
    # x_ref / o_ref: VMEM tile (1, tile_rows, 128) of batch element b
    b = pl.program_id(0)
    scale = scale_ref[b].astype(x_ref.dtype)          # compute in input dtype
    o_ref[...] = (x_ref[...] * scale).astype(o_ref.dtype)


def droppath_forward(x, prob, training, key, *, tile_rows=DEFAULT_TILE_ROWS):
    """JAX/Pallas equivalent of MNSIM droppath.forward. x is NCHW (or any ndim>=1)."""
    if prob is None or prob == 0.0 or not training:
        return x
    if not (0.0 <= float(prob) < 1.0):
        raise ValueError("droppath prob must be in [0, 1)")  # keep == 0 would give inf

    # NOTE: for tiny tensors (< ~1 MiB) a fused XLA multiply is faster than any
    # pallas_call launch; production code may add that fast path.  Kept off here
    # so the kernel itself is exercised.

    keep = 1.0 - float(prob)
    B = x.shape[0]
    orig_shape = x.shape
    dtype = x.dtype

    # per-sample uniforms (same role as torch.rand(shape=(B,1,1,1)))
    u = jax.random.uniform(key, (B,), dtype=jnp.float32)
    scales = jnp.floor(keep + u) / keep               # (B,) f32: 0.0 or 1/keep

    # flatten each sample to a lane-dense slab; avoid the pad copy entirely in
    # the common case where the per-sample size is a multiple of 128.
    flat = x.reshape(B, -1)
    n = flat.shape[1]
    lanes = 128
    rem = n % lanes
    if rem != 0:
        padded_n = n + (lanes - rem)
        flat = jnp.pad(flat, ((0, 0), (0, lanes - rem)))
    else:
        padded_n = n
    rows = padded_n // lanes
    x3 = flat.reshape(B, rows, lanes)                 # free reshape when rem == 0

    # row-tile size: either covers the full rows extent or is a multiple of 8
    tr = min(int(tile_rows), rows)
    if tr != rows:
        tr = max(8, (tr // 8) * 8)
    grid = (B, pl.cdiv(rows, tr))

    out = pl.pallas_call(
        _droppath_kernel,
        out_shape=jax.ShapeDtypeStruct((B, rows, lanes), dtype),
        grid_spec=pltpu.PrefetchScalarGridSpec(
            num_scalar_prefetch=1,
            grid=grid,
            in_specs=[pl.BlockSpec((1, tr, lanes), lambda b, r, scales: (b, r, 0))],
            out_specs=pl.BlockSpec((1, tr, lanes), lambda b, r, scales: (b, r, 0)),
        ),
        compiler_params=pltpu.CompilerParams(
            dimension_semantics=("parallel", "parallel")),
    )(scales, x3)

    if rem != 0:
        out = out.reshape(B, padded_n)[:, :n]
    return out.reshape(orig_shape)


if __name__ == "__main__":
    key = jax.random.PRNGKey(0)
    kx, kdrop, kx2 = jax.random.split(key, 3)
    prob = 0.3
    keep = 1.0 - prob

    # reference scales built from the same uniforms the wrapper draws
    u = jax.random.uniform(kdrop, (2,), dtype=jnp.float32)
    scales_ref = jnp.floor(keep + u) / keep

    # --- case 1: small NCHW f32, flattened size 4*16*16 = 1024 (128-aligned, no pad) ---
    x = jax.random.normal(kx, (2, 4, 16, 16), dtype=jnp.float32)
    y = jax.block_until_ready(droppath_forward(x, prob, True, kdrop))
    ref = x * scales_ref[:, None, None, None]
    assert jnp.allclose(y, ref, atol=1e-6, rtol=1e-6), "f32 aligned case mismatch"

    # --- case 2: bf16 input with ragged flattened size (3*10*10 = 300 -> pad path) ---
    xb = jax.random.normal(kx2, (2, 3, 10, 10), dtype=jnp.bfloat16)
    yb = jax.block_until_ready(droppath_forward(xb, prob, True, kdrop))
    refb = xb * scales_ref.astype(jnp.bfloat16)[:, None, None, None]
    assert jnp.allclose(yb.astype(jnp.float32), refb.astype(jnp.float32),
                        atol=1e-2, rtol=1e-2), "bf16 padded case mismatch"

    # --- case 3: multi-tile rows axis (rows=768, tile_rows=512 -> 2 tiles, last partial) ---
    xl = jax.random.normal(kx, (2, 8, 96, 128), dtype=jnp.float32)
    yl = jax.block_until_ready(droppath_forward(xl, prob, True, kdrop, tile_rows=512))
    refl = xl * scales_ref[:, None, None, None]
    assert jnp.allclose(yl, refl, atol=1e-6, rtol=1e-6), "multi-tile case mismatch"

    # --- eval / prob=0 paths -> identity ---
    y_eval = jax.block_until_ready(droppath_forward(x, prob, False, kdrop))
    assert jnp.array_equal(y_eval, x)
    y_p0 = jax.block_until_ready(droppath_forward(x, 0.0, True, kdrop))
    assert jnp.array_equal(y_p0, x)

    print("KERNEL_OK")
</pallas_src>

<mosaic_0001>
module attributes {stable_mosaic.version = 11 : i64} {
  func.func @_droppath_kernel(%arg0: i32, %arg1: i32, %arg2: memref<2xf32, #tpu.memory_space<smem>>, %arg3: memref<1x8x128xf32, #tpu.memory_space<vmem>>, %arg4: memref<1x8x128xf32, #tpu.memory_space<vmem>>) attributes {dimension_semantics = [#tpu.dimension_semantics<parallel>, #tpu.dimension_semantics<parallel>], iteration_bounds = array<i64: 2, 1>, scalar_prefetch = 1 : i64, scratch_operands = 0 : i64, tpu.core_type = #tpu.core_type<tc>, window_params = [{transform_indices = @transform_0, window_bounds = array<i64: 1, 8, 128>}, {transform_indices = @transform_1, window_bounds = array<i64: 1, 8, 128>}]} {
    %0 = arith.index_cast %arg0 : i32 to index
    %1 = memref.load %arg2[%0] : memref<2xf32, #tpu.memory_space<smem>>
    %c0 = arith.constant 0 : index
    %c0_0 = arith.constant 0 : index
    %c0_1 = arith.constant 0 : index
    %2 = vector.load %arg3[%c0, %c0_0, %c0_1] : memref<1x8x128xf32, #tpu.memory_space<vmem>>, vector<1x8x128xf32>
    %3 = vector.broadcast %1 : f32 to vector<1x8x128xf32>
    %4 = arith.mulf %2, %3 : vector<1x8x128xf32>
    %c0_2 = arith.constant 0 : index
    %c0_3 = arith.constant 0 : index
    %c0_4 = arith.constant 0 : index
    %5 = vector.load %arg4[%c0_2, %c0_3, %c0_4] : memref<1x8x128xf32, #tpu.memory_space<vmem>>, vector<1x8x128xf32>
    tpu.vector_store %arg4[%c0_2, %c0_3, %c0_4], %4 {strides = array<i32>} : memref<1x8x128xf32, #tpu.memory_space<vmem>>, vector<1x8x128xf32>,
    return
  }
  func.func @transform_0(%arg0: i32, %arg1: i32, %arg2: memref<2xf32, #tpu.memory_space<smem>>) -> (i32, i32, i32) {
    %c0_i32 = arith.constant 0 : i32
    %c0_i32_0 = arith.constant 0 : i32
    return %arg0, %arg1, %c0_i32 : i32, i32, i32
  }
  func.func @transform_1(%arg0: i32, %arg1: i32, %arg2: memref<2xf32, #tpu.memory_space<smem>>) -> (i32, i32, i32) {
    %c0_i32 = arith.constant 0 : i32
    %c0_i32_0 = arith.constant 0 : i32
    return %arg0, %arg1, %c0_i32 : i32, i32, i32
  }
}

</mosaic_0001>

<llo_original>
// kernel: tpu_custom_call.1
$region0: #{tpu_custom_call.1}
  #allocation0 [shape = 'u32[]', space=smem, size = 0x4, offset = 0x4, fixed_abs, tag = 'smem constant byte address 0x4 - core index']
  #allocation1 [shape = 'u32[144,128]{1,0:T(1,128)}', space=vmem, size = 0x12000, scoped, tag = 'internal scratch']
  #allocation2 [shape = 's32[1]{0}', space=sflag, size = 0x4, scoped, tag = 'scoped memory for tpu_custom_call.1']
  #allocation3 [shape = 'u8[512]{0}', space=smem, size = 0x200, scoped, tag = 'prefetched SMEM operand 0']
  %s0 = inlined_call_operand.hbm [shape: f32[2], index: 0, kind: input, shape index: {}]
  %s1 = inlined_call_operand.hbm [shape: f32[2,8,128], index: 1, kind: input, shape index: {}]
  %s2 = inlined_call_operand.hbm [shape: f32[2,8,128], index: 2, kind: output, shape index: {}]
  %s3 = sld [smem:[#allocation0]]
  $region41: #{tpu_custom_call.1} parent=0
    _
  %s5 = ssub.s32 1, %s3
  %s6 = scalar_select 0, %s5, %s3
  %8 = dma.hbm_to_smem %s0, 16, [#allocation3], [#allocation2]
  %9 = dma.done [#allocation2], 16
  %10 = sfence
  $region1: #{tpu_custom_call.1} parent=0
    #allocation4 [shape = 'u8[8192]{0}', space=vmem, size = 0x2000, scoped, tag = 'input window, operand 1']
    #allocation5 [shape = 's32[2]{0}', space=sflag, size = 0x8, scoped, tag = 'scoped memory for tpu_custom_call.1']
    #allocation6 [shape = 's32[2]{0}', space=sflag, size = 0x8, scoped, tag = 'scoped memory for tpu_custom_call.1']
    #allocation7 [shape = 'u8[8192]{0}', space=vmem, size = 0x2000, scoped, tag = 'output window, operand 0']
    %11 = vsyncpa [#allocation5], 0
    %s12 = scalar_lea.sflag [#allocation5], 1
    %13 = vsyncpa %s12, 0
    %14 = vsyncpa [#allocation6], 0
    %s15 = scalar_lea.sflag [#allocation6], 1
    %16 = vsyncpa %s15, 0
    loop: start=0, step=1, limit=4
    $region2: #{tpu_custom_call.1} parent=1 // loop_pre_header
      _
    $region3: #{tpu_custom_call.1} parent=1 // loop_header
      %s18 = sphi 0, %s22
      %p19 = scmp.ge.s32.totalorder %s18, 4
      %s25 = sphi 0, %s37
      %s26 = sphi 0, %s33
      %s27 = sphi 0, %s25
      %s28 = sphi 0, %s26
      %s29 = sphi 0, %s27
      %s30 = sphi 0, %s28
      %s42 = sphi 0, %s44
      %s45 = sphi 0, %s42
      %s46 = sphi 0, %s45
      %s62 = sphi 0, %s46
      %s70 = sphi 0, %s72
      %s73 = sphi 0, %s70
      %s74 = sphi 0, %s73
      %s90 = sphi 0, %s74
    $region4: #{tpu_custom_call.1} parent=1 // loop_header_branch
      %21 = sbr.rel (%p19) target = $region8
    $region5: #{tpu_custom_call.1} parent=1 // loop_body
      %s23 = ssub.s32 %s18, 1
      %s24 = ssub.s32 %s18, 2
      %s31 = sadd.s32 1, %s26
      %p32 = scmp.ge.s32.totalorder %s31, 1
      %s33 = scalar_select %p32, 0, %s31
      %s34 = sadd.s32 1, %s25
      %s35 = scalar_select %p32, %s34, %s25
      %p36 = scmp.ge.s32.totalorder %s35, 2
      %s37 = scalar_select %p36, 0, %s35
      %s38 = ssub.s32 %s25, %s37
      %s39 = ssub.s32 %s26, %s33
      %s40 = sor.u32 %s38, %s39
      %p41 = scmp.eq.s32.totalorder %s40, 0
      %s43 = sadd.s32 %s42, 1
      %s44 = scalar_select %p41, %s42, %s43
      %p47 = pneg %p41
      %p48 = scmp.eq.s32.totalorder %s18, 1
      %p49 = por %p47, %p48
      %p50 = scmp.ne.s32.totalorder %s42, %s45
      %p51 = scmp.eq.s32.totalorder %s18, 0
      %p52 = por %p50, %p51
      %p53 = scmp.ne.s32.totalorder %s42, %s45
      %p54 = scmp.eq.s32.totalorder %s23, 1
      %p55 = por %p53, %p54
      %p56 = scmp.ne.s32.totalorder %s45, %s46
      %p57 = scmp.eq.s32.totalorder %s23, 0
      %p58 = por %p56, %p57
      %p59 = scmp.ne.s32.totalorder %s45, %s46
      %p60 = scmp.eq.s32.totalorder %s24, 1
      %p61 = por %p59, %p60
      %p63 = scmp.ne.s32.totalorder %s46, %s62
      %p64 = scmp.eq.s32.totalorder %s24, 0
      %p65 = por %p63, %p64
      %s66 = ssub.s32 %s25, %s37
      %s67 = ssub.s32 %s26, %s33
      %s68 = sor.u32 %s66, %s67
      %p69 = scmp.eq.s32.totalorder %s68, 0
      %s71 = sadd.s32 %s70, 1
      %s72 = scalar_select %p69, %s70, %s71
      %p75 = pneg %p69
      %p76 = scmp.eq.s32.totalorder %s18, 1
      %p77 = por %p75, %p76
      %p78 = scmp.ne.s32.totalorder %s70, %s73
      %p79 = scmp.eq.s32.totalorder %s18, 0
      %p80 = por %p78, %p79
      %p81 = scmp.ne.s32.totalorder %s70, %s73
      %p82 = scmp.eq.s32.totalorder %s23, 1
      %p83 = por %p81, %p82
      %p84 = scmp.ne.s32.totalorder %s73, %s74
      %p85 = scmp.eq.s32.totalorder %s23, 0
      %p86 = por %p84, %p85
      %p87 = scmp.ne.s32.totalorder %s73, %s74
      %p88 = scmp.eq.s32.totalorder %s24, 1
      %p89 = por %p87, %p88
      %p91 = scmp.ne.s32.totalorder %s74, %s90
      %p92 = scmp.eq.s32.totalorder %s24, 0
      %p93 = por %p91, %p92
      %p94 = scmp.le.s32.totalorder 1, %s18
      %p95 = scmp.lt.s32.totalorder %s18, 3
      %p96 = pnand %p94, %p95
      %p97 = pneg %p96
      // Predicated region
      $region9: #{tpu_custom_call.1} parent=5 // pred_check
        _
      $region10: #{tpu_custom_call.1} parent=5 // pred_check_branch
        %99 = sbr.rel (%p96) target = $region12
      $region11: #{tpu_custom_call.1} parent=5 // pred_region
        %s100 = ssub.s32 %s18, 1
      $region12: #{tpu_custom_call.1} parent=5 // pred_fallthru
        _
      %p101 = scmp.lt.s32.totalorder %s18, 2
      // Predicated region
      $region13: #{tpu_custom_call.1} parent=5 // pred_check
        %p102 = pneg %p101
      $region14: #{tpu_custom_call.1} parent=5 // pred_check_branch
        %104 = sbr.rel (%p102) target = $region16
      $region15: #{tpu_custom_call.1} parent=5 // pred_region
        // Predicated region
        $region17: #{tpu_custom_call.1} parent=15 // pred_check
          %p105 = pneg %p52
        $region18: #{tpu_custom_call.1} parent=15 // pred_check_branch
          %107 = sbr.rel (%p105) target = $region20
        $region19: #{tpu_custom_call.1} parent=15 // pred_region
          %s108 = sand.u32 %s42, 1
          %s109 = scalar_lea.sflag [#allocation5], %s108
          %s110 = sand.u32 %s42, 1
          %s111 = smul.addr %s110, 8
          %s112 = scalar_lea.vmem [#allocation4], %s111
          %s114 = ssub.s32 128, 128
          %115 = vsyncadd %s109, %s114
          %s116 = sadd.s32 %s26, %s25
          %s117 = smul.addr %s116, 128
          %s118 = scalar_lea.hbm %s1, %s117
          %s120 = sshll.u32 %s112, 4
          %s121 = int_to_ptr.vmem [resolvable:$true] %s120
          %123 = dma.hbm_to_vmem [thread:$0]  %s118, 128, %s121, %s109
        $region20: #{tpu_custom_call.1} parent=15 // pred_fallthru
          _
      $region16: #{tpu_custom_call.1} parent=5 // pred_fallthru
        _
      %p124 = scmp.le.s32.totalorder 1, %s18
      %p125 = scmp.lt.s32.totalorder %s18, 3
      %p126 = pnand %p124, %p125
      %p127 = pneg %p126
      // Predicated region
      $region21: #{tpu_custom_call.1} parent=5 // pred_check
        _
      $region22: #{tpu_custom_call.1} parent=5 // pred_check_branch
        %129 = sbr.rel (%p126) target = $region24
      $region23: #{tpu_custom_call.1} parent=5 // pred_region
        %s130 = ssub.s32 %s18, 1
        %s131 = sand.u32 %s45, 1
        %s132 = scalar_lea.sflag [#allocation5], %s131
        %s133 = sand.u32 %s45, 1
        %s134 = smul.addr %s133, 8
        %s135 = scalar_lea.vmem [#allocation4], %s134
        // Predicated region
        $region25: #{tpu_custom_call.1} parent=23 // pred_check
          %p136 = pneg %p58
        $region26: #{tpu_custom_call.1} parent=23 // pred_check_branch
          %138 = sbr.rel (%p136) target = $region28
        $region27: #{tpu_custom_call.1} parent=23 // pred_region
          %139 = dma.done %s132, 128
        $region28: #{tpu_custom_call.1} parent=23 // pred_fallthru
          _
        %s140 = sand.u32 %s45, 1
        %s141 = scalar_lea.sflag [#allocation5], %s140
        %s142 = sand.u32 %s45, 1
        %s143 = smul.addr %s142, 8
        %s144 = scalar_lea.vmem [#allocation4], %s143
        %p145 = pneg %p58
        %p146 = pneg %p55
        %p147 = pneg %p86
        %p148 = pneg %p83
        %s149 = sand.u32 %s73, 1
        %s150 = scalar_lea.sflag [#allocation6], %s149
        %s151 = sand.u32 %s73, 1
        %s152 = smul.addr %s151, 8
        %s153 = scalar_lea.vmem [#allocation7], %s152
        %s154 = sld [smem:[#allocation3 + %s27]]
        %v155 = vld [vmem:[%s135] sm:$0xff]
        %v156 = vstv %s154
        %v157 = vmul.f32 %v155, %v156
        %158 = vst [vmem:[%s153] sm:$0xff] %v157
        %s159 = sand.u32 %s73, 1
        %s160 = scalar_lea.sflag [#allocation6], %s159
        %s161 = sand.u32 %s73, 1
        %s162 = smul.addr %s161, 8
        %s163 = scalar_lea.vmem [#allocation7], %s162
        // Predicated region
        $region29: #{tpu_custom_call.1} parent=23 // pred_check
          %p164 = pneg %p83
        $region30: #{tpu_custom_call.1} parent=23 // pred_check_branch
          %166 = sbr.rel (%p164) target = $region32
        $region31: #{tpu_custom_call.1} parent=23 // pred_region
          %s168 = ssub.s32 128, 128
          %169 = vsyncadd %s160, %s168
          %s170 = sadd.s32 %s28, %s27
          %s171 = smul.addr %s170, 128
          %s172 = scalar_lea.hbm %s2, %s171
          %s174 = sshll.u32 %s163, 4
          %s175 = int_to_ptr.vmem [resolvable:$true] %s174
          %177 = dma.vmem_to_hbm [thread:$0]  %s175, 128, %s172, %s160
        $region32: #{tpu_custom_call.1} parent=23 // pred_fallthru
          _
      $region24: #{tpu_custom_call.1} parent=5 // pred_fallthru
        _
      %p178 = scmp.le.s32.totalorder 2, %s18
      // Predicated region
      $region33: #{tpu_custom_call.1} parent=5 // pred_check
        %p179 = pneg %p178
      $region34: #{tpu_custom_call.1} parent=5 // pred_check_branch
        %181 = sbr.rel (%p179) target = $region36
      $region35: #{tpu_custom_call.1} parent=5 // pred_region
        %s182 = ssub.s32 %s18, 2
        // Predicated region
        $region37: #{tpu_custom_call.1} parent=35 // pred_check
          %p183 = pneg %p89
        $region38: #{tpu_custom_call.1} parent=35 // pred_check_branch
          %185 = sbr.rel (%p183) target = $region40
        $region39: #{tpu_custom_call.1} parent=35 // pred_region
          %s186 = sand.u32 %s74, 1
          %s187 = scalar_lea.sflag [#allocation6], %s186
          %s188 = sand.u32 %s74, 1
          %s189 = smul.addr %s188, 8
          %s190 = scalar_lea.vmem [#allocation7], %s189
          %191 = dma.done %s187, 128
        $region40: #{tpu_custom_call.1} parent=35 // pred_fallthru
          _
      $region36: #{tpu_custom_call.1} parent=5 // pred_fallthru
        _
    $region6: #{tpu_custom_call.1} parent=1 // loop_footer
      %s22 = sadd.s32 1, %s18
    $region7: #{tpu_custom_call.1} parent=1 // loop_footer_branch
      %17 = sbr.rel target = $region3
    $region8: #{tpu_custom_call.1} parent=1 // loop_exit
      _
    %192 = vsyncpa [#allocation5], 1
    %s193 = scalar_lea.sflag [#allocation5], 1
    %194 = vsyncpa %s193, 1
    %195 = vsyncpa [#allocation6], 1
    %s196 = scalar_lea.sflag [#allocation6], 1
    %197 = vsyncpa %s196, 1

</llo_original>
